<compile_context>
chip_gen: v7x
topology: tpu7x:2x2x1
jax: 0.10.0
libtpu: 0.0.40
codegen_flags: <defaults>
</compile_context>

<pallas_src>
import jax
import jax.numpy as jnp
from jax.experimental import pallas as pl
from jax.experimental.pallas import tpu as pltpu

EPS = 1e-5
TAPS = 9
PAD = 4


def _make_fused_kernel(c_in, c_out, w_out, n, has_res_conv):
    """Fused conv1+bn1+relu -> conv2+bn2 [+ conv/bn/relu residual | identity] -> relu."""
    inv_n = 1.0 / float(n)

    def bn_train(acc, g_ref, b_ref):
        # PyTorch BatchNorm2d training mode: per-channel batch stats, biased variance.
        mean = jnp.sum(acc, axis=1, keepdims=True) * inv_n
        cen = acc - mean
        var = jnp.sum(cen * cen, axis=1, keepdims=True) * inv_n
        return cen * jax.lax.rsqrt(var + EPS) * g_ref[...] + b_ref[...]

    def kernel(*refs):
        if has_res_conv:
            (x1_ref, w1_ref, g1_ref, b1_ref,
             w2_ref, g2_ref, b2_ref,
             xr_ref, wr_ref, gr_ref, br_ref, o_ref) = refs
        else:
            (x1_ref, w1_ref, g1_ref, b1_ref,
             w2_ref, g2_ref, b2_ref,
             res_ref, o_ref) = refs

        # ---- conv1 + bn1 + relu: one (Cout, 9*Cin) @ (9*Cin, N) bf16 MXU matmul, f32 acc
        acc1 = jnp.dot(w1_ref[...], x1_ref[...], preferred_element_type=jnp.float32)
        y1 = jnp.maximum(bn_train(acc1, g1_ref, b1_ref), 0.0)              # (Cout, N) f32

        # ---- conv2 im2col built from y1 directly in VMEM (no HBM round-trip)
        zpad = jnp.zeros((c_out, PAD), jnp.float32)
        y1p = jnp.concatenate([zpad, y1, zpad], axis=1)                    # (Cout, N + 8)
        w_idx = jax.lax.broadcasted_iota(jnp.int32, (1, n), 1) % w_out
        pieces = []
        for k in range(TAPS):
            d = k - PAD                                                    # temporal shift of tap k
            sl = y1p[:, k:k + n]                                           # y1[:, p + d], zero at edges
            valid = jnp.logical_and(w_idx + d >= 0, w_idx + d < w_out)     # stay inside this row
            pieces.append(jnp.where(valid, sl, 0.0))
        y1_cols = jnp.concatenate(pieces, axis=0).astype(w2_ref.dtype)     # (9*Cout, N) bf16

        acc2 = jnp.dot(w2_ref[...], y1_cols, preferred_element_type=jnp.float32)
        y2 = bn_train(acc2, g2_ref, b2_ref)                                # (Cout, N) f32

        # ---- residual branch
        if has_res_conv:
            accr = jnp.dot(wr_ref[...], xr_ref[...], preferred_element_type=jnp.float32)
            res = jnp.maximum(bn_train(accr, gr_ref, br_ref), 0.0)
        else:
            res = res_ref[...]

        o_ref[...] = jnp.maximum(y2 + res, 0.0)

    return kernel


def _full_spec(shape):
    zeros = (0,) * len(shape)
    return pl.BlockSpec(shape, lambda i, _z=zeros: _z)


def residual_forward(x_nchw, params):
    """Pallas implementation of Residual.forward.  x_nchw: (B, Cin, H, W) NCHW."""
    B, c_in, H, W = x_nchw.shape
    c_out = params["w2"].shape[0]
    stride = 2 if c_in != c_out else 1
    h_out = (H - 1) // stride + 1            # kernel_h = 1, pad_h = 0
    w_out = (W - 1) // stride + 1            # kernel_w = 9, pad_w = 4
    n = B * h_out * w_out

    f32, bf16 = jnp.float32, jnp.bfloat16

    # conv1 im2col in transposed lane-dense layout: (9*Cin, N), N = B*h_out*w_out on lanes.
    xs = x_nchw[:, :, ::stride, :]                                    # (B, Cin, h_out, W)
    xp = jnp.pad(xs, ((0, 0), (0, 0), (0, 0), (PAD, PAD)))            # pad time axis by 4
    cols = jnp.stack(
        [xp[:, :, :, k:k + stride * (w_out - 1) + 1:stride] for k in range(TAPS)],
        axis=0)                                                       # (9, B, Cin, h_out, w_out)
    x1_t = jnp.transpose(cols, (0, 2, 1, 3, 4)).reshape(TAPS * c_in, n).astype(bf16)

    # PyTorch (Cout, Cin, 1, 9) -> (Cout, 9*Cin) matching the im2col row order [k*Cin + c].
    w1_t = jnp.transpose(params["w1"][:, :, 0, :], (0, 2, 1)).reshape(c_out, TAPS * c_in).astype(bf16)
    w2_t = jnp.transpose(params["w2"][:, :, 0, :], (0, 2, 1)).reshape(c_out, TAPS * c_out).astype(bf16)

    g1 = params["g1"].reshape(c_out, 1).astype(f32)
    b1 = params["b1"].reshape(c_out, 1).astype(f32)
    g2 = params["g2"].reshape(c_out, 1).astype(f32)
    b2 = params["b2"].reshape(c_out, 1).astype(f32)

    has_res_conv = stride == 2
    if has_res_conv:
        xr = x_nchw[:, :, ::2, ::2]                                   # 1x1 conv, stride 2, no pad
        xr_t = jnp.transpose(xr, (1, 0, 2, 3)).reshape(c_in, n).astype(bf16)
        wr_t = params["wr"][:, :, 0, 0].astype(bf16)                  # (Cout, Cin)
        gr = params["gr"].reshape(c_out, 1).astype(f32)
        br = params["br"].reshape(c_out, 1).astype(f32)
        inputs = [x1_t, w1_t, g1, b1, w2_t, g2, b2, xr_t, wr_t, gr, br]
    else:
        res_t = jnp.transpose(x_nchw, (1, 0, 2, 3)).reshape(c_out, n).astype(f32)
        inputs = [x1_t, w1_t, g1, b1, w2_t, g2, b2, res_t]

    kernel = _make_fused_kernel(c_in, c_out, w_out, n, has_res_conv)

    out = pl.pallas_call(
        kernel,
        out_shape=jax.ShapeDtypeStruct((c_out, n), f32),
        grid=(1,),
        in_specs=[_full_spec(a.shape) for a in inputs],
        out_specs=_full_spec((c_out, n)),
        compiler_params=pltpu.CompilerParams(dimension_semantics=("arbitrary",)),
    )(*inputs)

    out = out.reshape(c_out, B, h_out, w_out)
    return jnp.transpose(out, (1, 0, 2, 3))                           # back to NCHW


# ------------------------- pure-JAX f32 reference (for validation) -------------------------
def _bn_train(y, gamma, beta):
    mean = jnp.mean(y, axis=(0, 2, 3), keepdims=True)
    var = jnp.mean((y - mean) ** 2, axis=(0, 2, 3), keepdims=True)
    return (y - mean) / jnp.sqrt(var + EPS) * gamma.reshape(1, -1, 1, 1) \
        + beta.reshape(1, -1, 1, 1)


def residual_reference(x, params):
    c_in = x.shape[1]
    c_out = params["w2"].shape[0]
    stride = 2 if c_in != c_out else 1

    def conv(v, w, s, p):
        return jax.lax.conv_general_dilated(
            v, w, (s, s), ((0, 0), (p, p)),
            dimension_numbers=("NCHW", "OIHW", "NCHW"))

    out = jax.nn.relu(_bn_train(conv(x, params["w1"], stride, 4),
                                params["g1"], params["b1"]))
    out = _bn_train(conv(out, params["w2"], 1, 4), params["g2"], params["b2"])
    if stride == 2:
        res = jax.nn.relu(_bn_train(conv(x, params["wr"], 2, 0),
                                    params["gr"], params["br"]))
    else:
        res = x
    return jax.nn.relu(out + res)


def make_params(key, c_in, c_out):
    ks = jax.random.split(key, 9)
    p = {
        "w1": 0.2 * jax.random.normal(ks[0], (c_out, c_in, 1, 9), jnp.float32),
        "w2": 0.2 * jax.random.normal(ks[1], (c_out, c_out, 1, 9), jnp.float32),
        "g1": 1.0 + 0.1 * jax.random.normal(ks[2], (c_out,), jnp.float32),
        "b1": 0.1 * jax.random.normal(ks[3], (c_out,), jnp.float32),
        "g2": 1.0 + 0.1 * jax.random.normal(ks[4], (c_out,), jnp.float32),
        "b2": 0.1 * jax.random.normal(ks[5], (c_out,), jnp.float32),
    }
    if c_in != c_out:
        p["wr"] = 0.2 * jax.random.normal(ks[6], (c_out, c_in, 1, 1), jnp.float32)
        p["gr"] = 1.0 + 0.1 * jax.random.normal(ks[7], (c_out,), jnp.float32)
        p["br"] = 0.1 * jax.random.normal(ks[8], (c_out,), jnp.float32)
    return p


if __name__ == "__main__":
    key = jax.random.PRNGKey(0)
    kx1, kx2, kp1, kp2 = jax.random.split(key, 4)

    # Kernel uses bf16 MXU inputs with f32 accumulation; reference is pure f32,
    # so compare at mixed-precision tolerance.
    TOL = 3e-2

    # Case 1: in_channels != out_channels -> stride 2, conv+bn+relu residual branch.
    x1 = jax.random.normal(kx1, (2, 4, 1, 16), jnp.float32)   # (B, Cin, H=1, T)
    p1 = make_params(kp1, 4, 8)
    out1 = jax.block_until_ready(residual_forward(x1, p1))
    ref1 = residual_reference(x1, p1)
    assert out1.shape == (2, 8, 1, 8), out1.shape
    assert jnp.allclose(out1, ref1, atol=TOL, rtol=TOL), \
        float(jnp.max(jnp.abs(out1 - ref1)))

    # Case 2: in_channels == out_channels -> stride 1, identity residual.
    x2 = jax.random.normal(kx2, (2, 8, 1, 16), jnp.float32)
    p2 = make_params(kp2, 8, 8)
    out2 = jax.block_until_ready(residual_forward(x2, p2))
    ref2 = residual_reference(x2, p2)
    assert out2.shape == (2, 8, 1, 16), out2.shape
    assert jnp.allclose(out2, ref2, atol=TOL, rtol=TOL), \
        float(jnp.max(jnp.abs(out2 - ref2)))

    print("KERNEL_OK")
</pallas_src>

<mosaic_0001>
module attributes {stable_mosaic.version = 11 : i64} {
  func.func @kernel(%arg0: i32, %arg1: memref<36x16xbf16, #tpu.memory_space<vmem>>, %arg2: memref<8x36xbf16, #tpu.memory_space<vmem>>, %arg3: memref<8x1xf32, #tpu.memory_space<vmem>>, %arg4: memref<8x1xf32, #tpu.memory_space<vmem>>, %arg5: memref<8x72xbf16, #tpu.memory_space<vmem>>, %arg6: memref<8x1xf32, #tpu.memory_space<vmem>>, %arg7: memref<8x1xf32, #tpu.memory_space<vmem>>, %arg8: memref<4x16xbf16, #tpu.memory_space<vmem>>, %arg9: memref<8x4xbf16, #tpu.memory_space<vmem>>, %arg10: memref<8x1xf32, #tpu.memory_space<vmem>>, %arg11: memref<8x1xf32, #tpu.memory_space<vmem>>, %arg12: memref<8x16xf32, #tpu.memory_space<vmem>>) attributes {dimension_semantics = [#tpu.dimension_semantics<arbitrary>], iteration_bounds = array<i64: 1>, scalar_prefetch = 0 : i64, scratch_operands = 0 : i64, tpu.core_type = #tpu.core_type<tc>, window_params = [{pipeline_mode = #tpu.pipeline_mode<synchronous>, transform_indices = @transform_0, window_bounds = array<i64: 36, 16>}, {pipeline_mode = #tpu.pipeline_mode<synchronous>, transform_indices = @transform_1, window_bounds = array<i64: 8, 36>}, {pipeline_mode = #tpu.pipeline_mode<synchronous>, transform_indices = @transform_2, window_bounds = array<i64: 8, 1>}, {pipeline_mode = #tpu.pipeline_mode<synchronous>, transform_indices = @transform_3, window_bounds = array<i64: 8, 1>}, {pipeline_mode = #tpu.pipeline_mode<synchronous>, transform_indices = @transform_4, window_bounds = array<i64: 8, 72>}, {pipeline_mode = #tpu.pipeline_mode<synchronous>, transform_indices = @transform_5, window_bounds = array<i64: 8, 1>}, {pipeline_mode = #tpu.pipeline_mode<synchronous>, transform_indices = @transform_6, window_bounds = array<i64: 8, 1>}, {pipeline_mode = #tpu.pipeline_mode<synchronous>, transform_indices = @transform_7, window_bounds = array<i64: 4, 16>}, {pipeline_mode = #tpu.pipeline_mode<synchronous>, transform_indices = @transform_8, window_bounds = array<i64: 8, 4>}, {pipeline_mode = #tpu.pipeline_mode<synchronous>, transform_indices = @transform_9, window_bounds = array<i64: 8, 1>}, {pipeline_mode = #tpu.pipeline_mode<synchronous>, transform_indices = @transform_10, window_bounds = array<i64: 8, 1>}, {pipeline_mode = #tpu.pipeline_mode<synchronous>, transform_indices = @transform_11, window_bounds = array<i64: 8, 16>}]} {
    %c0 = arith.constant 0 : index
    %c0_0 = arith.constant 0 : index
    %0 = vector.load %arg2[%c0, %c0_0] : memref<8x36xbf16, #tpu.memory_space<vmem>>, vector<8x36xbf16>
    %c0_1 = arith.constant 0 : index
    %c0_2 = arith.constant 0 : index
    %1 = vector.load %arg1[%c0_1, %c0_2] : memref<36x16xbf16, #tpu.memory_space<vmem>>, vector<36x16xbf16>
    %cst = arith.constant dense<0.000000e+00> : vector<8x16xf32>
    %2 = tpu.matmul %0, %1, %cst {dimension_numbers = #tpu.dot_dimension_numbers<[1], [0], [0], [1], [0, 0, 1, 1], [], []>} : vector<8x36xbf16>, vector<36x16xbf16>, vector<8x16xf32> -> vector<8x16xf32>
    %cst_3 = arith.constant dense<0.000000e+00> : vector<8xf32>
    %3 = vector.multi_reduction <add>, %2, %cst_3 [1] : vector<8x16xf32> to vector<8xf32>
    %4 = vector.shape_cast %3 : vector<8xf32> to vector<8x1xf32>
    %cst_4 = arith.constant 6.250000e-02 : f32
    %5 = vector.broadcast %cst_4 : f32 to vector<8x1xf32>
    %6 = arith.mulf %4, %5 : vector<8x1xf32>
    %7 = vector.broadcast %6 : vector<8x1xf32> to vector<8x16xf32>
    %8 = arith.subf %2, %7 : vector<8x16xf32>
    %9 = arith.mulf %8, %8 : vector<8x16xf32>
    %cst_5 = arith.constant dense<0.000000e+00> : vector<8xf32>
    %10 = vector.multi_reduction <add>, %9, %cst_5 [1] : vector<8x16xf32> to vector<8xf32>
    %11 = vector.shape_cast %10 : vector<8xf32> to vector<8x1xf32>
    %cst_6 = arith.constant 6.250000e-02 : f32
    %12 = vector.broadcast %cst_6 : f32 to vector<8x1xf32>
    %13 = arith.mulf %11, %12 : vector<8x1xf32>
    %cst_7 = arith.constant 9.99999974E-6 : f32
    %14 = vector.broadcast %cst_7 : f32 to vector<8x1xf32>
    %15 = arith.addf %13, %14 : vector<8x1xf32>
    %16 = math.rsqrt %15 : vector<8x1xf32>
    %17 = vector.broadcast %16 : vector<8x1xf32> to vector<8x16xf32>
    %18 = arith.mulf %8, %17 : vector<8x16xf32>
    %c0_8 = arith.constant 0 : index
    %c0_9 = arith.constant 0 : index
    %19 = vector.load %arg3[%c0_8, %c0_9] : memref<8x1xf32, #tpu.memory_space<vmem>>, vector<8x1xf32>
    %20 = vector.broadcast %19 : vector<8x1xf32> to vector<8x16xf32>
    %21 = arith.mulf %18, %20 : vector<8x16xf32>
    %c0_10 = arith.constant 0 : index
    %c0_11 = arith.constant 0 : index
    %22 = vector.load %arg4[%c0_10, %c0_11] : memref<8x1xf32, #tpu.memory_space<vmem>>, vector<8x1xf32>
    %23 = vector.broadcast %22 : vector<8x1xf32> to vector<8x16xf32>
    %24 = arith.addf %21, %23 : vector<8x16xf32>
    %cst_12 = arith.constant 0.000000e+00 : f32
    %25 = vector.broadcast %cst_12 : f32 to vector<8x16xf32>
    %26 = arith.maximumf %24, %25 : vector<8x16xf32>
    %cst_13 = arith.constant 0.000000e+00 : f32
    %27 = vector.broadcast %cst_13 : f32 to vector<8x4xf32>
    %28 = tpu.concatenate %27, %26, %27 in 1 : vector<8x4xf32>, vector<8x16xf32>, vector<8x4xf32> -> vector<8x24xf32>
    %29 = tpu.iota {dimensions = array<i32: 1>} : vector<1x16xi32>
    %c8_i32 = arith.constant 8 : i32
    %c0_i32 = arith.constant 0 : i32
    %30 = arith.cmpi eq, %c8_i32, %c0_i32 : i32
    %c1_i32 = arith.constant 1 : i32
    %31 = arith.select %30, %c1_i32, %c8_i32 : i32
    %32 = vector.broadcast %31 : i32 to vector<1x16xi32>
    %33 = arith.remsi %29, %32 : vector<1x16xi32>
    %c0_i32_14 = arith.constant 0 : i32
    %34 = vector.broadcast %c0_i32_14 : i32 to vector<1x16xi32>
    %35 = arith.cmpi ne, %33, %34 : vector<1x16xi32>
    %c0_i32_15 = arith.constant 0 : i32
    %36 = vector.broadcast %c0_i32_15 : i32 to vector<1x16xi32>
    %37 = arith.cmpi slt, %33, %36 : vector<1x16xi32>
    %c0_i32_16 = arith.constant 0 : i32
    %38 = arith.cmpi slt, %31, %c0_i32_16 : i32
    %39 = vector.broadcast %38 : i1 to vector<1x16xi1>
    %40 = vector.broadcast %39 : vector<1x16xi1> to vector<1x16xi1>
    %41 = arith.xori %37, %40 : vector<1x16xi1>
    %42 = arith.andi %41, %35 : vector<1x16xi1>
    %43 = vector.broadcast %31 : i32 to vector<1x16xi32>
    %44 = arith.addi %33, %43 : vector<1x16xi32>
    %45 = arith.select %42, %44, %33 : vector<1x16xi1>, vector<1x16xi32>
    %46 = vector.extract_strided_slice %28 {offsets = [0, 0], sizes = [8, 16], strides = [1, 1]} : vector<8x24xf32> to vector<8x16xf32>
    %c-4_i32 = arith.constant -4 : i32
    %47 = vector.broadcast %c-4_i32 : i32 to vector<1x16xi32>
    %48 = arith.addi %45, %47 : vector<1x16xi32>
    %c0_i32_17 = arith.constant 0 : i32
    %49 = vector.broadcast %c0_i32_17 : i32 to vector<1x16xi32>
    %50 = arith.cmpi sge, %48, %49 : vector<1x16xi32>
    %c-4_i32_18 = arith.constant -4 : i32
    %51 = vector.broadcast %c-4_i32_18 : i32 to vector<1x16xi32>
    %52 = arith.addi %45, %51 : vector<1x16xi32>
    %c8_i32_19 = arith.constant 8 : i32
    %53 = vector.broadcast %c8_i32_19 : i32 to vector<1x16xi32>
    %54 = arith.cmpi slt, %52, %53 : vector<1x16xi32>
    %55 = arith.andi %50, %54 : vector<1x16xi1>
    %cst_20 = arith.constant 0.000000e+00 : f32
    %56 = vector.shape_cast %55 : vector<1x16xi1> to vector<1x16xi1>
    %57 = vector.broadcast %56 : vector<1x16xi1> to vector<8x16xi1>
    %58 = vector.broadcast %cst_20 : f32 to vector<8x16xf32>
    %59 = arith.select %57, %46, %58 : vector<8x16xi1>, vector<8x16xf32>
    %60 = vector.extract_strided_slice %28 {offsets = [0, 1], sizes = [8, 16], strides = [1, 1]} : vector<8x24xf32> to vector<8x16xf32>
    %c-3_i32 = arith.constant -3 : i32
    %61 = vector.broadcast %c-3_i32 : i32 to vector<1x16xi32>
    %62 = arith.addi %45, %61 : vector<1x16xi32>
    %c0_i32_21 = arith.constant 0 : i32
    %63 = vector.broadcast %c0_i32_21 : i32 to vector<1x16xi32>
    %64 = arith.cmpi sge, %62, %63 : vector<1x16xi32>
    %c-3_i32_22 = arith.constant -3 : i32
    %65 = vector.broadcast %c-3_i32_22 : i32 to vector<1x16xi32>
    %66 = arith.addi %45, %65 : vector<1x16xi32>
    %c8_i32_23 = arith.constant 8 : i32
    %67 = vector.broadcast %c8_i32_23 : i32 to vector<1x16xi32>
    %68 = arith.cmpi slt, %66, %67 : vector<1x16xi32>
    %69 = arith.andi %64, %68 : vector<1x16xi1>
    %cst_24 = arith.constant 0.000000e+00 : f32
    %70 = vector.shape_cast %69 : vector<1x16xi1> to vector<1x16xi1>
    %71 = vector.broadcast %70 : vector<1x16xi1> to vector<8x16xi1>
    %72 = vector.broadcast %cst_24 : f32 to vector<8x16xf32>
    %73 = arith.select %71, %60, %72 : vector<8x16xi1>, vector<8x16xf32>
    %74 = vector.extract_strided_slice %28 {offsets = [0, 2], sizes = [8, 16], strides = [1, 1]} : vector<8x24xf32> to vector<8x16xf32>
    %c-2_i32 = arith.constant -2 : i32
    %75 = vector.broadcast %c-2_i32 : i32 to vector<1x16xi32>
    %76 = arith.addi %45, %75 : vector<1x16xi32>
    %c0_i32_25 = arith.constant 0 : i32
    %77 = vector.broadcast %c0_i32_25 : i32 to vector<1x16xi32>
    %78 = arith.cmpi sge, %76, %77 : vector<1x16xi32>
    %c-2_i32_26 = arith.constant -2 : i32
    %79 = vector.broadcast %c-2_i32_26 : i32 to vector<1x16xi32>
    %80 = arith.addi %45, %79 : vector<1x16xi32>
    %c8_i32_27 = arith.constant 8 : i32
    %81 = vector.broadcast %c8_i32_27 : i32 to vector<1x16xi32>
    %82 = arith.cmpi slt, %80, %81 : vector<1x16xi32>
    %83 = arith.andi %78, %82 : vector<1x16xi1>
    %cst_28 = arith.constant 0.000000e+00 : f32
    %84 = vector.shape_cast %83 : vector<1x16xi1> to vector<1x16xi1>
    %85 = vector.broadcast %84 : vector<1x16xi1> to vector<8x16xi1>
    %86 = vector.broadcast %cst_28 : f32 to vector<8x16xf32>
    %87 = arith.select %85, %74, %86 : vector<8x16xi1>, vector<8x16xf32>
    %88 = vector.extract_strided_slice %28 {offsets = [0, 3], sizes = [8, 16], strides = [1, 1]} : vector<8x24xf32> to vector<8x16xf32>
    %c-1_i32 = arith.constant -1 : i32
    %89 = vector.broadcast %c-1_i32 : i32 to vector<1x16xi32>
    %90 = arith.addi %45, %89 : vector<1x16xi32>
    %c0_i32_29 = arith.constant 0 : i32
    %91 = vector.broadcast %c0_i32_29 : i32 to vector<1x16xi32>
    %92 = arith.cmpi sge, %90, %91 : vector<1x16xi32>
    %c-1_i32_30 = arith.constant -1 : i32
    %93 = vector.broadcast %c-1_i32_30 : i32 to vector<1x16xi32>
    %94 = arith.addi %45, %93 : vector<1x16xi32>
    %c8_i32_31 = arith.constant 8 : i32
    %95 = vector.broadcast %c8_i32_31 : i32 to vector<1x16xi32>
    %96 = arith.cmpi slt, %94, %95 : vector<1x16xi32>
    %97 = arith.andi %92, %96 : vector<1x16xi1>
    %cst_32 = arith.constant 0.000000e+00 : f32
    %98 = vector.shape_cast %97 : vector<1x16xi1> to vector<1x16xi1>
    %99 = vector.broadcast %98 : vector<1x16xi1> to vector<8x16xi1>
    %100 = vector.broadcast %cst_32 : f32 to vector<8x16xf32>
    %101 = arith.select %99, %88, %100 : vector<8x16xi1>, vector<8x16xf32>
    %102 = vector.extract_strided_slice %28 {offsets = [0, 4], sizes = [8, 16], strides = [1, 1]} : vector<8x24xf32> to vector<8x16xf32>
    %c0_i32_33 = arith.constant 0 : i32
    %103 = vector.broadcast %c0_i32_33 : i32 to vector<1x16xi32>
    %104 = arith.addi %45, %103 : vector<1x16xi32>
    %c0_i32_34 = arith.constant 0 : i32
    %105 = vector.broadcast %c0_i32_34 : i32 to vector<1x16xi32>
    %106 = arith.cmpi sge, %104, %105 : vector<1x16xi32>
    %c0_i32_35 = arith.constant 0 : i32
    %107 = vector.broadcast %c0_i32_35 : i32 to vector<1x16xi32>
    %108 = arith.addi %45, %107 : vector<1x16xi32>
    %c8_i32_36 = arith.constant 8 : i32
    %109 = vector.broadcast %c8_i32_36 : i32 to vector<1x16xi32>
    %110 = arith.cmpi slt, %108, %109 : vector<1x16xi32>
    %111 = arith.andi %106, %110 : vector<1x16xi1>
    %cst_37 = arith.constant 0.000000e+00 : f32
    %112 = vector.shape_cast %111 : vector<1x16xi1> to vector<1x16xi1>
    %113 = vector.broadcast %112 : vector<1x16xi1> to vector<8x16xi1>
    %114 = vector.broadcast %cst_37 : f32 to vector<8x16xf32>
    %115 = arith.select %113, %102, %114 : vector<8x16xi1>, vector<8x16xf32>
    %116 = vector.extract_strided_slice %28 {offsets = [0, 5], sizes = [8, 16], strides = [1, 1]} : vector<8x24xf32> to vector<8x16xf32>
    %c1_i32_38 = arith.constant 1 : i32
    %117 = vector.broadcast %c1_i32_38 : i32 to vector<1x16xi32>
    %118 = arith.addi %45, %117 : vector<1x16xi32>
    %c0_i32_39 = arith.constant 0 : i32
    %119 = vector.broadcast %c0_i32_39 : i32 to vector<1x16xi32>
    %120 = arith.cmpi sge, %118, %119 : vector<1x16xi32>
    %c1_i32_40 = arith.constant 1 : i32
    %121 = vector.broadcast %c1_i32_40 : i32 to vector<1x16xi32>
    %122 = arith.addi %45, %121 : vector<1x16xi32>
    %c8_i32_41 = arith.constant 8 : i32
    %123 = vector.broadcast %c8_i32_41 : i32 to vector<1x16xi32>
    %124 = arith.cmpi slt, %122, %123 : vector<1x16xi32>
    %125 = arith.andi %120, %124 : vector<1x16xi1>
    %cst_42 = arith.constant 0.000000e+00 : f32
    %126 = vector.shape_cast %125 : vector<1x16xi1> to vector<1x16xi1>
    %127 = vector.broadcast %126 : vector<1x16xi1> to vector<8x16xi1>
    %128 = vector.broadcast %cst_42 : f32 to vector<8x16xf32>
    %129 = arith.select %127, %116, %128 : vector<8x16xi1>, vector<8x16xf32>
    %130 = vector.extract_strided_slice %28 {offsets = [0, 6], sizes = [8, 16], strides = [1, 1]} : vector<8x24xf32> to vector<8x16xf32>
    %c2_i32 = arith.constant 2 : i32
    %131 = vector.broadcast %c2_i32 : i32 to vector<1x16xi32>
    %132 = arith.addi %45, %131 : vector<1x16xi32>
    %c0_i32_43 = arith.constant 0 : i32
    %133 = vector.broadcast %c0_i32_43 : i32 to vector<1x16xi32>
    %134 = arith.cmpi sge, %132, %133 : vector<1x16xi32>
    %c2_i32_44 = arith.constant 2 : i32
    %135 = vector.broadcast %c2_i32_44 : i32 to vector<1x16xi32>
    %136 = arith.addi %45, %135 : vector<1x16xi32>
    %c8_i32_45 = arith.constant 8 : i32
    %137 = vector.broadcast %c8_i32_45 : i32 to vector<1x16xi32>
    %138 = arith.cmpi slt, %136, %137 : vector<1x16xi32>
    %139 = arith.andi %134, %138 : vector<1x16xi1>
    %cst_46 = arith.constant 0.000000e+00 : f32
    %140 = vector.shape_cast %139 : vector<1x16xi1> to vector<1x16xi1>
    %141 = vector.broadcast %140 : vector<1x16xi1> to vector<8x16xi1>
    %142 = vector.broadcast %cst_46 : f32 to vector<8x16xf32>
    %143 = arith.select %141, %130, %142 : vector<8x16xi1>, vector<8x16xf32>
    %144 = vector.extract_strided_slice %28 {offsets = [0, 7], sizes = [8, 16], strides = [1, 1]} : vector<8x24xf32> to vector<8x16xf32>
    %c3_i32 = arith.constant 3 : i32
    %145 = vector.broadcast %c3_i32 : i32 to vector<1x16xi32>
    %146 = arith.addi %45, %145 : vector<1x16xi32>
    %c0_i32_47 = arith.constant 0 : i32
    %147 = vector.broadcast %c0_i32_47 : i32 to vector<1x16xi32>
    %148 = arith.cmpi sge, %146, %147 : vector<1x16xi32>
    %c3_i32_48 = arith.constant 3 : i32
    %149 = vector.broadcast %c3_i32_48 : i32 to vector<1x16xi32>
    %150 = arith.addi %45, %149 : vector<1x16xi32>
    %c8_i32_49 = arith.constant 8 : i32
    %151 = vector.broadcast %c8_i32_49 : i32 to vector<1x16xi32>
    %152 = arith.cmpi slt, %150, %151 : vector<1x16xi32>
    %153 = arith.andi %148, %152 : vector<1x16xi1>
    %cst_50 = arith.constant 0.000000e+00 : f32
    %154 = vector.shape_cast %153 : vector<1x16xi1> to vector<1x16xi1>
    %155 = vector.broadcast %154 : vector<1x16xi1> to vector<8x16xi1>
    %156 = vector.broadcast %cst_50 : f32 to vector<8x16xf32>
    %157 = arith.select %155, %144, %156 : vector<8x16xi1>, vector<8x16xf32>
    %158 = vector.extract_strided_slice %28 {offsets = [0, 8], sizes = [8, 16], strides = [1, 1]} : vector<8x24xf32> to vector<8x16xf32>
    %c4_i32 = arith.constant 4 : i32
    %159 = vector.broadcast %c4_i32 : i32 to vector<1x16xi32>
    %160 = arith.addi %45, %159 : vector<1x16xi32>
    %c0_i32_51 = arith.constant 0 : i32
    %161 = vector.broadcast %c0_i32_51 : i32 to vector<1x16xi32>
    %162 = arith.cmpi sge, %160, %161 : vector<1x16xi32>
    %c4_i32_52 = arith.constant 4 : i32
    %163 = vector.broadcast %c4_i32_52 : i32 to vector<1x16xi32>
    %164 = arith.addi %45, %163 : vector<1x16xi32>
    %c8_i32_53 = arith.constant 8 : i32
    %165 = vector.broadcast %c8_i32_53 : i32 to vector<1x16xi32>
    %166 = arith.cmpi slt, %164, %165 : vector<1x16xi32>
    %167 = arith.andi %162, %166 : vector<1x16xi1>
    %cst_54 = arith.constant 0.000000e+00 : f32
    %168 = vector.shape_cast %167 : vector<1x16xi1> to vector<1x16xi1>
    %169 = vector.broadcast %168 : vector<1x16xi1> to vector<8x16xi1>
    %170 = vector.broadcast %cst_54 : f32 to vector<8x16xf32>
    %171 = arith.select %169, %158, %170 : vector<8x16xi1>, vector<8x16xf32>
    %172 = tpu.concatenate %59, %73, %87, %101, %115, %129, %143, %157, %171 in 0 : vector<8x16xf32>, vector<8x16xf32>, vector<8x16xf32>, vector<8x16xf32>, vector<8x16xf32>, vector<8x16xf32>, vector<8x16xf32>, vector<8x16xf32>, vector<8x16xf32> -> vector<72x16xf32>
    %173 = arith.truncf %172 : vector<72x16xf32> to vector<72x16xbf16>
    %c0_55 = arith.constant 0 : index
    %c0_56 = arith.constant 0 : index
    %174 = vector.load %arg5[%c0_55, %c0_56] : memref<8x72xbf16, #tpu.memory_space<vmem>>, vector<8x72xbf16>
    %cst_57 = arith.constant dense<0.000000e+00> : vector<8x16xf32>
    %175 = tpu.matmul %174, %173, %cst_57 {dimension_numbers = #tpu.dot_dimension_numbers<[1], [0], [0], [1], [0, 0, 1, 1], [], []>} : vector<8x72xbf16>, vector<72x16xbf16>, vector<8x16xf32> -> vector<8x16xf32>
    %cst_58 = arith.constant dense<0.000000e+00> : vector<8xf32>
    %176 = vector.multi_reduction <add>, %175, %cst_58 [1] : vector<8x16xf32> to vector<8xf32>
    %177 = vector.shape_cast %176 : vector<8xf32> to vector<8x1xf32>
    %cst_59 = arith.constant 6.250000e-02 : f32
    %178 = vector.broadcast %cst_59 : f32 to vector<8x1xf32>
    %179 = arith.mulf %177, %178 : vector<8x1xf32>
    %180 = vector.broadcast %179 : vector<8x1xf32> to vector<8x16xf32>
    %181 = arith.subf %175, %180 : vector<8x16xf32>
    %182 = arith.mulf %181, %181 : vector<8x16xf32>
    %cst_60 = arith.constant dense<0.000000e+00> : vector<8xf32>
    %183 = vector.multi_reduction <add>, %182, %cst_60 [1] : vector<8x16xf32> to vector<8xf32>
    %184 = vector.shape_cast %183 : vector<8xf32> to vector<8x1xf32>
    %cst_61 = arith.constant 6.250000e-02 : f32
    %185 = vector.broadcast %cst_61 : f32 to vector<8x1xf32>
    %186 = arith.mulf %184, %185 : vector<8x1xf32>
    %cst_62 = arith.constant 9.99999974E-6 : f32
    %187 = vector.broadcast %cst_62 : f32 to vector<8x1xf32>
    %188 = arith.addf %186, %187 : vector<8x1xf32>
    %189 = math.rsqrt %188 : vector<8x1xf32>
    %190 = vector.broadcast %189 : vector<8x1xf32> to vector<8x16xf32>
    %191 = arith.mulf %181, %190 : vector<8x16xf32>
    %c0_63 = arith.constant 0 : index
    %c0_64 = arith.constant 0 : index
    %192 = vector.load %arg6[%c0_63, %c0_64] : memref<8x1xf32, #tpu.memory_space<vmem>>, vector<8x1xf32>
    %193 = vector.broadcast %192 : vector<8x1xf32> to vector<8x16xf32>
    %194 = arith.mulf %191, %193 : vector<8x16xf32>
    %c0_65 = arith.constant 0 : index
    %c0_66 = arith.constant 0 : index
    %195 = vector.load %arg7[%c0_65, %c0_66] : memref<8x1xf32, #tpu.memory_space<vmem>>, vector<8x1xf32>
    %196 = vector.broadcast %195 : vector<8x1xf32> to vector<8x16xf32>
    %197 = arith.addf %194, %196 : vector<8x16xf32>
    %c0_67 = arith.constant 0 : index
    %c0_68 = arith.constant 0 : index
    %198 = vector.load %arg9[%c0_67, %c0_68] : memref<8x4xbf16, #tpu.memory_space<vmem>>, vector<8x4xbf16>
    %c0_69 = arith.constant 0 : index
    %c0_70 = arith.constant 0 : index
    %199 = vector.load %arg8[%c0_69, %c0_70] : memref<4x16xbf16, #tpu.memory_space<vmem>>, vector<4x16xbf16>
    %cst_71 = arith.constant dense<0.000000e+00> : vector<8x16xf32>
    %200 = tpu.matmul %198, %199, %cst_71 {dimension_numbers = #tpu.dot_dimension_numbers<[1], [0], [0], [1], [0, 0, 1, 1], [], []>} : vector<8x4xbf16>, vector<4x16xbf16>, vector<8x16xf32> -> vector<8x16xf32>
    %cst_72 = arith.constant dense<0.000000e+00> : vector<8xf32>
    %201 = vector.multi_reduction <add>, %200, %cst_72 [1] : vector<8x16xf32> to vector<8xf32>
    %202 = vector.shape_cast %201 : vector<8xf32> to vector<8x1xf32>
    %cst_73 = arith.constant 6.250000e-02 : f32
    %203 = vector.broadcast %cst_73 : f32 to vector<8x1xf32>
    %204 = arith.mulf %202, %203 : vector<8x1xf32>
    %205 = vector.broadcast %204 : vector<8x1xf32> to vector<8x16xf32>
    %206 = arith.subf %200, %205 : vector<8x16xf32>
    %207 = arith.mulf %206, %206 : vector<8x16xf32>
    %cst_74 = arith.constant dense<0.000000e+00> : vector<8xf32>
    %208 = vector.multi_reduction <add>, %207, %cst_74 [1] : vector<8x16xf32> to vector<8xf32>
    %209 = vector.shape_cast %208 : vector<8xf32> to vector<8x1xf32>
    %cst_75 = arith.constant 6.250000e-02 : f32
    %210 = vector.broadcast %cst_75 : f32 to vector<8x1xf32>
    %211 = arith.mulf %209, %210 : vector<8x1xf32>
    %cst_76 = arith.constant 9.99999974E-6 : f32
    %212 = vector.broadcast %cst_76 : f32 to vector<8x1xf32>
    %213 = arith.addf %211, %212 : vector<8x1xf32>
    %214 = math.rsqrt %213 : vector<8x1xf32>
    %215 = vector.broadcast %214 : vector<8x1xf32> to vector<8x16xf32>
    %216 = arith.mulf %206, %215 : vector<8x16xf32>
    %c0_77 = arith.constant 0 : index
    %c0_78 = arith.constant 0 : index
    %217 = vector.load %arg10[%c0_77, %c0_78] : memref<8x1xf32, #tpu.memory_space<vmem>>, vector<8x1xf32>
    %218 = vector.broadcast %217 : vector<8x1xf32> to vector<8x16xf32>
    %219 = arith.mulf %216, %218 : vector<8x16xf32>
    %c0_79 = arith.constant 0 : index
    %c0_80 = arith.constant 0 : index
    %220 = vector.load %arg11[%c0_79, %c0_80] : memref<8x1xf32, #tpu.memory_space<vmem>>, vector<8x1xf32>
    %221 = vector.broadcast %220 : vector<8x1xf32> to vector<8x16xf32>
    %222 = arith.addf %219, %221 : vector<8x16xf32>
    %cst_81 = arith.constant 0.000000e+00 : f32
    %223 = vector.broadcast %cst_81 : f32 to vector<8x16xf32>
    %224 = arith.maximumf %222, %223 : vector<8x16xf32>
    %225 = arith.addf %197, %224 : vector<8x16xf32>
    %cst_82 = arith.constant 0.000000e+00 : f32
    %226 = vector.broadcast %cst_82 : f32 to vector<8x16xf32>
    %227 = arith.maximumf %225, %226 : vector<8x16xf32>
    %c0_83 = arith.constant 0 : index
    %c0_84 = arith.constant 0 : index
    %228 = vector.load %arg12[%c0_83, %c0_84] : memref<8x16xf32, #tpu.memory_space<vmem>>, vector<8x16xf32>
    tpu.vector_store %arg12[%c0_83, %c0_84], %227 {strides = array<i32>} : memref<8x16xf32, #tpu.memory_space<vmem>>, vector<8x16xf32>,
    return
  }
  func.func @transform_0(%arg0: i32) -> (i32, i32) {
    %c0_i32 = arith.constant 0 : i32
    %c0_i32_0 = arith.constant 0 : i32
    %c0_i32_1 = arith.constant 0 : i32
    return %c0_i32, %c0_i32_0 : i32, i32
  }
  func.func @transform_1(%arg0: i32) -> (i32, i32) {
    %c0_i32 = arith.constant 0 : i32
    %c0_i32_0 = arith.constant 0 : i32
    %c0_i32_1 = arith.constant 0 : i32
    return %c0_i32, %c0_i32_0 : i32, i32
  }
  func.func @transform_2(%arg0: i32) -> (i32, i32) {
    %c0_i32 = arith.constant 0 : i32
    %c0_i32_0 = arith.constant 0 : i32
    %c0_i32_1 = arith.constant 0 : i32
    return %c0_i32, %c0_i32_0 : i32, i32
  }
  func.func @transform_3(%arg0: i32) -> (i32, i32) {
    %c0_i32 = arith.constant 0 : i32
    %c0_i32_0 = arith.constant 0 : i32
    %c0_i32_1 = arith.constant 0 : i32
    return %c0_i32, %c0_i32_0 : i32, i32
  }
  func.func @transform_4(%arg0: i32) -> (i32, i32) {
    %c0_i32 = arith.constant 0 : i32
    %c0_i32_0 = arith.constant 0 : i32
    %c0_i32_1 = arith.constant 0 : i32
    return %c0_i32, %c0_i32_0 : i32, i32
  }
  func.func @transform_5(%arg0: i32) -> (i32, i32) {
    %c0_i32 = arith.constant 0 : i32
    %c0_i32_0 = arith.constant 0 : i32
    %c0_i32_1 = arith.constant 0 : i32
    return %c0_i32, %c0_i32_0 : i32, i32
  }
  func.func @transform_6(%arg0: i32) -> (i32, i32) {
    %c0_i32 = arith.constant 0 : i32
    %c0_i32_0 = arith.constant 0 : i32
    %c0_i32_1 = arith.constant 0 : i32
    return %c0_i32, %c0_i32_0 : i32, i32
  }
  func.func @transform_7(%arg0: i32) -> (i32, i32) {
    %c0_i32 = arith.constant 0 : i32
    %c0_i32_0 = arith.constant 0 : i32
    %c0_i32_1 = arith.constant 0 : i32
    return %c0_i32, %c0_i32_0 : i32, i32
  }
  func.func @transform_8(%arg0: i32) -> (i32, i32) {
    %c0_i32 = arith.constant 0 : i32
    %c0_i32_0 = arith.constant 0 : i32
    %c0_i32_1 = arith.constant 0 : i32
    return %c0_i32, %c0_i32_0 : i32, i32
  }
  func.func @transform_9(%arg0: i32) -> (i32, i32) {
    %c0_i32 = arith.constant 0 : i32
    %c0_i32_0 = arith.constant 0 : i32
    %c0_i32_1 = arith.constant 0 : i32
    return %c0_i32, %c0_i32_0 : i32, i32
  }
  func.func @transform_10(%arg0: i32) -> (i32, i32) {
    %c0_i32 = arith.constant 0 : i32
    %c0_i32_0 = arith.constant 0 : i32
    %c0_i32_1 = arith.constant 0 : i32
    return %c0_i32, %c0_i32_0 : i32, i32
  }
  func.func @transform_11(%arg0: i32) -> (i32, i32) {
    %c0_i32 = arith.constant 0 : i32
    %c0_i32_0 = arith.constant 0 : i32
    %c0_i32_1 = arith.constant 0 : i32
    return %c0_i32, %c0_i32_0 : i32, i32
  }
}

</mosaic_0001>

<llo_original>
// kernel: tpu_custom_call.1
$region0: #{tpu_custom_call.1}
  #allocation0 [shape = 'u32[]', space=smem, size = 0x4, offset = 0x4, fixed_abs, tag = 'smem constant byte address 0x4 - core index']
  #allocation1 [shape = 'u32[144,128]{1,0:T(1,128)}', space=vmem, size = 0x12000, scoped, tag = 'internal scratch']
  %s0 = inlined_call_operand.vmem [shape: bf16[36,16], index: 0, kind: input, shape index: {}]
  %s1 = inlined_call_operand.vmem [shape: bf16[8,36], index: 1, kind: input, shape index: {}]
  %s2 = inlined_call_operand.vmem [shape: f32[8,1], index: 2, kind: input, shape index: {}]
  %s3 = inlined_call_operand.vmem [shape: f32[8,1], index: 3, kind: input, shape index: {}]
  %s4 = inlined_call_operand.vmem [shape: bf16[8,72], index: 4, kind: input, shape index: {}]
  %s5 = inlined_call_operand.vmem [shape: f32[8,1], index: 5, kind: input, shape index: {}]
  %s6 = inlined_call_operand.vmem [shape: f32[8,1], index: 6, kind: input, shape index: {}]
  %s7 = inlined_call_operand.vmem [shape: bf16[4,16], index: 7, kind: input, shape index: {}]
  %s8 = inlined_call_operand.vmem [shape: bf16[8,4], index: 8, kind: input, shape index: {}]
  %s9 = inlined_call_operand.vmem [shape: f32[8,1], index: 9, kind: input, shape index: {}]
  %s10 = inlined_call_operand.vmem [shape: f32[8,1], index: 10, kind: input, shape index: {}]
  %s11 = inlined_call_operand.hbm [shape: f32[8,16], index: 11, kind: output, shape index: {}]
  %s12 = sld [smem:[#allocation0]]
  $region54: #{tpu_custom_call.1} parent=0
    _
  %s14 = ssub.s32 1, %s12
  %s15 = scalar_select 0, %s14, %s12
  $region1: #{tpu_custom_call.1} parent=0
    #allocation2 [shape = 'u8[4096]{0}', space=vmem, size = 0x1000, scoped, tag = 'output window, operand 0, single buffered']
    #allocation3 [shape = 's32[1]{0}', space=sflag, size = 0x4, scoped, tag = 'scoped memory for tpu_custom_call.1']
    %16 = vsyncpa [#allocation3], 0
    // Predicated region
    $region2: #{tpu_custom_call.1} parent=1 // pred_check
      _
    $region3: #{tpu_custom_call.1} parent=1 // pred_check_branch
      %18 = sbr.rel (0) target = $region5
    $region4: #{tpu_custom_call.1} parent=1 // pred_region
      _
    $region5: #{tpu_custom_call.1} parent=1 // pred_fallthru
      _
    // Predicated region
    $region6: #{tpu_custom_call.1} parent=1 // pred_check
      _
    $region7: #{tpu_custom_call.1} parent=1 // pred_check_branch
      %20 = sbr.rel (0) target = $region9
    $region8: #{tpu_custom_call.1} parent=1 // pred_region
      _
    $region9: #{tpu_custom_call.1} parent=1 // pred_fallthru
      _
    // Predicated region
    $region10: #{tpu_custom_call.1} parent=1 // pred_check
      _
    $region11: #{tpu_custom_call.1} parent=1 // pred_check_branch
      %22 = sbr.rel (0) target = $region13
    $region12: #{tpu_custom_call.1} parent=1 // pred_region
      _
    $region13: #{tpu_custom_call.1} parent=1 // pred_fallthru
      _
    // Predicated region
    $region14: #{tpu_custom_call.1} parent=1 // pred_check
      _
    $region15: #{tpu_custom_call.1} parent=1 // pred_check_branch
      %24 = sbr.rel (0) target = $region17
    $region16: #{tpu_custom_call.1} parent=1 // pred_region
      _
    $region17: #{tpu_custom_call.1} parent=1 // pred_fallthru
      _
    // Predicated region
    $region18: #{tpu_custom_call.1} parent=1 // pred_check
      _
    $region19: #{tpu_custom_call.1} parent=1 // pred_check_branch
      %26 = sbr.rel (0) target = $region21
    $region20: #{tpu_custom_call.1} parent=1 // pred_region
      _
    $region21: #{tpu_custom_call.1} parent=1 // pred_fallthru
      _
    // Predicated region
    $region22: #{tpu_custom_call.1} parent=1 // pred_check
      _
    $region23: #{tpu_custom_call.1} parent=1 // pred_check_branch
      %28 = sbr.rel (0) target = $region25
    $region24: #{tpu_custom_call.1} parent=1 // pred_region
      _
    $region25: #{tpu_custom_call.1} parent=1 // pred_fallthru
      _
    // Predicated region
    $region26: #{tpu_custom_call.1} parent=1 // pred_check
      _
    $region27: #{tpu_custom_call.1} parent=1 // pred_check_branch
      %30 = sbr.rel (0) target = $region29
    $region28: #{tpu_custom_call.1} parent=1 // pred_region
      _
    $region29: #{tpu_custom_call.1} parent=1 // pred_fallthru
      _
    // Predicated region
    $region30: #{tpu_custom_call.1} parent=1 // pred_check
      _
    $region31: #{tpu_custom_call.1} parent=1 // pred_check_branch
      %32 = sbr.rel (0) target = $region33
    $region32: #{tpu_custom_call.1} parent=1 // pred_region
      _
    $region33: #{tpu_custom_call.1} parent=1 // pred_fallthru
      _
    // Predicated region
    $region34: #{tpu_custom_call.1} parent=1 // pred_check
      _
    $region35: #{tpu_custom_call.1} parent=1 // pred_check_branch
      %34 = sbr.rel (0) target = $region37
    $region36: #{tpu_custom_call.1} parent=1 // pred_region
      _
    $region37: #{tpu_custom_call.1} parent=1 // pred_fallthru
      _
    // Predicated region
    $region38: #{tpu_custom_call.1} parent=1 // pred_check
      _
    $region39: #{tpu_custom_call.1} parent=1 // pred_check_branch
      %36 = sbr.rel (0) target = $region41
    $region40: #{tpu_custom_call.1} parent=1 // pred_region
      _
    $region41: #{tpu_custom_call.1} parent=1 // pred_fallthru
      _
    // Predicated region
    $region42: #{tpu_custom_call.1} parent=1 // pred_check
      _
    $region43: #{tpu_custom_call.1} parent=1 // pred_check_branch
      %38 = sbr.rel (0) target = $region45
    $region44: #{tpu_custom_call.1} parent=1 // pred_region
      _
    $region45: #{tpu_custom_call.1} parent=1 // pred_fallthru
      _
    %v40 = vld [vmem:[%s1] sm:$0xf]
    %v41 = vld [vmem:[%s0] sm:$0xf]
    %v42 = vld [vmem:[%s0 + $0x4] sm:$0xf]
    %v43 = vld [vmem:[%s0 + $0x8] sm:$0xf]
    %v44 = vld [vmem:[%s0 + $0xc] sm:$0xf]
    %v45 = vld [vmem:[%s0 + $0x10] sm:$0x3]
    %v51 = vunpack.c.l.b16 %v41
    %v52 = vunpack.c.l.b16 %v42
    %v53 = vunpack.c.l.b16 %v43
    %v54 = vunpack.c.l.b16 %v44
    %v55 = vunpack.c.l.b16 %v45
    %v56 = vpack.c.b16 %v52, %v51
    %v57 = vpack.c.b16 %v54, %v53
    %v58 = vpack.c.b16 %v55, %v55
    %vm61 = vcmask 293888
    %v63 = vsel %vm61, %v40, 0
    %vm65 = vcmask 1041408
    %v67 = vsel %vm65, %v58, 0
    %69 = vmatprep.subr.bf16.mxu0 0
    %70 = vmatpush1.bf16.msra.mxu0 %v56
    %71 = vmatprep.subr.bf16.mxu0 0
    %72 = vmatpush1.bf16.msra.mxu0 %v57
    %73 = vmatprep.subr.bf16.mxu0 0
    %74 = vmatpush1.bf16.msra.mxu0 %v67
    %75 = vmatprep.subr.bf16.mxu0 0
    %76 = vmatpush1.bf16.msra.mxu0 0
    %77 = vmatprep.subr.bf16.mxu0 0
    %78 = vmatpush1.bf16.msra.mxu0 0
    %79 = vmatprep.subr.bf16.mxu0 0
    %80 = vmatpush1.bf16.msra.mxu0 0
    %81 = vmatprep.subr.bf16.mxu0 0
    %82 = vmatpush1.bf16.msra.mxu0 0
    %83 = vmatprep.subr.bf16.mxu0 0
    %84 = vmatpush1.bf16.msra.mxu0 0
    %85 = vmatprep.subr.bf16.mxu0 0
    %86 = vmatpush1.bf16.msra.mxu0 0
    %87 = vmatprep.subr.bf16.mxu0 0
    %88 = vmatpush1.bf16.msra.mxu0 0
    %89 = vmatprep.subr.bf16.mxu0 0
    %90 = vmatpush1.bf16.msra.mxu0 0
    %91 = vmatprep.subr.bf16.mxu0 0
    %92 = vmatpush1.bf16.msra.mxu0 0
    %93 = vmatprep.subr.bf16.mxu0 0
    %94 = vmatpush1.bf16.msra.mxu0 0
    %95 = vmatprep.subr.bf16.mxu0 0
    %96 = vmatpush1.bf16.msra.mxu0 0
    %97 = vmatprep.subr.bf16.mxu0 0
    %98 = vmatpush1.bf16.msra.mxu0 0
    %99 = vmatprep.subr.bf16.mxu0 0
    %100 = vmatpush1.bf16.msra.mxu0 0
    %101 = vmatprep.mubr.bf16.mxu0 0
    %102 = vmatmul.mubr.bf16.gmra.mrb[0].mxu0 %v63
    %v103 = vpop.f32.mrb[0].mxu0
    %v104 = vadd.f32 0.0, %v103
    %v105 = vpop.f32.mrb[0].mxu0
    %v106 = vpop.f32.mrb[0].mxu0
    %v107 = vpop.f32.mrb[0].mxu0
    %108 = vdwg.mxu0
    %vm109 = vcmask 130048
    %v110 = vsel %vm109, %v104, 0.0
    %111 = vadd.xlane.f32.xlu0 %v110
    %v112 = vpop.xlane.xlu0 %111
    %v113 = vmul.f32 %v112, 0.0625
    %v114 = vsub.f32 %v104, %v113
    %v115 = vmul.f32 %v114, %v114
    %v116 = vsel %vm109, %v115, 0.0
    %117 = vadd.xlane.f32.xlu0 %v116
    %v118 = vpop.xlane.xlu0 %117
    %v119 = vmul.f32 %v118, 0.0625
    %v120 = vadd.f32 %v119, 1e-05
    %v121 = vrsqrt.pop %v120
    %v122 = vmul.f32 %v114, %v121
    %v123 = vld [vmem:[%s2] sm:$0xff]
    %125 = vset.pattern.permute.xlu0 0
    %126 = vperm.xlu0 %125, %v123
    %v127 = vpop.permute.xlu0 %126
    %v129 = vmul.f32 %v122, %v127
    %v130 = vld [vmem:[%s3] sm:$0xff]
    %132 = vset.pattern.permute.xlu0 0
    %133 = vperm.xlu0 %132, %v130
    %v134 = vpop.permute.xlu0 %133
    %v136 = vadd.f32 %v129, %v134
    %v137 = vmax.f32 %v136, 0.0
    %139 = vrot.lane.b32.xlu0 %v137, 4
    %v140 = vpop.permute.xlu0 %139
    %vm142 = vcmask 31744
    %v143 = vsel %vm142, 0.0, %v140
    %vm144 = vcmask 162816
    %v145 = vsel %vm144, %v143, 0.0
    %v146 = vlaneseq
    %v147 = vand.u32 %v146, 127
    %vm148 = vcmp.lt.s32.totalorder %v147, 0
    %v149 = vsub.s32 0, %v147
    %v150 = vsel %vm148, %v149, %v147
    %v151 = vshrl.u32 %v150, 3
    %v152 = vand.u32 %v150, 7
    %v153 = vsub.s32 0, %v152
    %v154 = vsel %vm148, %v153, %v152
    %vm155 = vcmp.ne.s32.totalorder %v154, 0
    %vm156 = vcmp.lt.s32.totalorder %v154, 0
    %vm157 = vmand %vm156, %vm155
    %v158 = vadd.s32 %v154, 8
    %v159 = vsel %vm157, %v158, %v154
    %v160 = vadd.s32 %v159, 4294967292
    %vm161 = vcmp.ge.s32.totalorder %v160, 0
    %vm162 = vcmp.lt.s32.totalorder %v160, 8
    %vm163 = vmand %vm161, %vm162
    %v164 = vsel %vm163, 1, 0
    %vm165 = vcmp.eq.s32.totalorder %v164, 1
    %v166 = vsel %vm165, %v145, 0.0
    %v167 = vadd.s32 %v159, 4294967293
    %vm168 = vcmp.ge.s32.totalorder %v167, 0
    %vm169 = vcmp.lt.s32.totalorder %v167, 8
    %vm170 = vmand %vm168, %vm169
    %v171 = vsel %vm170, 1, 0
    %vm172 = vcmp.eq.s32.totalorder %v171, 1
    %174 = vrot.lane.b32.xlu0 %v145, 127
    %v175 = vpop.permute.xlu0 %174
    %v177 = vsel %vm172, %v175, 0.0
    %v178 = vadd.s32 %v159, 4294967294
    %vm179 = vcmp.ge.s32.totalorder %v178, 0
    %vm180 = vcmp.lt.s32.totalorder %v178, 8
    %vm181 = vmand %vm179, %vm180
    %v182 = vsel %vm181, 1, 0
    %vm183 = vcmp.eq.s32.totalorder %v182, 1
    %184 = vrot.lane.b32.xlu0 %v145, 126
    %v185 = vpop.permute.xlu0 %184
    %v187 = vsel %vm183, %v185, 0.0
    %v188 = vadd.s32 %v159, 4294967295
    %vm189 = vcmp.ge.s32.totalorder %v188, 0
    %vm190 = vcmp.lt.s32.totalorder %v188, 8
    %vm191 = vmand %vm189, %vm190
    %v192 = vsel %vm191, 1, 0
    %vm193 = vcmp.eq.s32.totalorder %v192, 1
    %194 = vrot.lane.b32.xlu0 %v145, 125
    %v195 = vpop.permute.xlu0 %194
    %v197 = vsel %vm193, %v195, 0.0
    %vm198 = vcmp.ge.s32.totalorder %v159, 0
    %vm199 = vcmp.lt.s32.totalorder %v159, 8
    %vm200 = vmand %vm198, %vm199
    %v201 = vsel %vm200, 1, 0
    %vm202 = vcmp.eq.s32.totalorder %v201, 1
    %203 = vrot.lane.b32.xlu0 %v145, 124
    %v204 = vpop.permute.xlu0 %203
    %v206 = vsel %vm202, %v204, 0.0
    %v207 = vadd.s32 %v159, 1
    %vm208 = vcmp.ge.s32.totalorder %v207, 0
    %vm209 = vcmp.lt.s32.totalorder %v207, 8
    %vm210 = vmand %vm208, %vm209
    %v211 = vsel %vm210, 1, 0
    %vm212 = vcmp.eq.s32.totalorder %v211, 1
    %213 = vrot.lane.b32.xlu0 %v145, 123
    %v214 = vpop.permute.xlu0 %213
    %v216 = vsel %vm212, %v214, 0.0
    %v217 = vadd.s32 %v159, 2
    %vm218 = vcmp.ge.s32.totalorder %v217, 0
    %vm219 = vcmp.lt.s32.totalorder %v217, 8
    %vm220 = vmand %vm218, %vm219
    %v221 = vsel %vm220, 1, 0
    %vm222 = vcmp.eq.s32.totalorder %v221, 1
    %223 = vrot.lane.b32.xlu0 %v145, 122
    %v224 = vpop.permute.xlu0 %223
    %v226 = vsel %vm222, %v224, 0.0
    %v227 = vadd.s32 %v159, 3
    %vm228 = vcmp.ge.s32.totalorder %v227, 0
    %vm229 = vcmp.lt.s32.totalorder %v227, 8
    %vm230 = vmand %vm228, %vm229
    %v231 = vsel %vm230, 1, 0
    %vm232 = vcmp.eq.s32.totalorder %v231, 1
    %233 = vrot.lane.b32.xlu0 %v145, 121
    %v234 = vpop.permute.xlu0 %233
    %v236 = vsel %vm232, %v234, 0.0
    %v237 = vadd.s32 %v159, 4
    %vm238 = vcmp.ge.s32.totalorder %v237, 0
    %vm239 = vcmp.lt.s32.totalorder %v237, 8
    %vm240 = vmand %vm238, %vm239
    %v241 = vsel %vm240, 1, 0
    %vm242 = vcmp.eq.s32.totalorder %v241, 1
    %243 = vrot.lane.b32.xlu0 %v145, 120
    %v244 = vpop.permute.xlu0 %243
    %v246 = vsel %vm242, %v244, 0.0
    %v247 = vpack.c.bf16 %v177, %v166
    %v248 = vpack.c.bf16 %v197, %v187
    %v249 = vpack.c.bf16 %v216, %v206
    %v250 = vpack.c.bf16 %v236, %v226
    %v251 = vpack.c.bf16 %v246, %v246
    %v252 = vld [vmem:[%s4] sm:$0xf]
    %vm253 = vcmask 588800
    %v255 = vsel %vm253, %v252, 0
    %vm257 = vcmask 1043456
    %v259 = vsel %vm257, %v251, 0
    %261 = vmatprep.subr.bf16.mxu0 0
    %262 = vmatpush1.bf16.msra.mxu0 %v247
    %263 = vmatprep.subr.bf16.mxu0 0
    %264 = vmatpush1.bf16.msra.mxu0 %v248
    %265 = vmatprep.subr.bf16.mxu0 0
    %266 = vmatpush1.bf16.msra.mxu0 %v249
    %267 = vmatprep.subr.bf16.mxu0 0
    %268 = vmatpush1.bf16.msra.mxu0 %v250
    %269 = vmatprep.subr.bf16.mxu0 0
    %270 = vmatpush1.bf16.msra.mxu0 %v259
    %271 = vmatprep.subr.bf16.mxu0 0
    %272 = vmatpush1.bf16.msra.mxu0 0
    %273 = vmatprep.subr.bf16.mxu0 0
    %274 = vmatpush1.bf16.msra.mxu0 0
    %275 = vmatprep.subr.bf16.mxu0 0
    %276 = vmatpush1.bf16.msra.mxu0 0
    %277 = vmatprep.subr.bf16.mxu0 0
    %278 = vmatpush1.bf16.msra.mxu0 0
    %279 = vmatprep.subr.bf16.mxu0 0
    %280 = vmatpush1.bf16.msra.mxu0 0
    %281 = vmatprep.subr.bf16.mxu0 0
    %282 = vmatpush1.bf16.msra.mxu0 0
    %283 = vmatprep.subr.bf16.mxu0 0
    %284 = vmatpush1.bf16.msra.mxu0 0
    %285 = vmatprep.subr.bf16.mxu0 0
    %286 = vmatpush1.bf16.msra.mxu0 0
    %287 = vmatprep.subr.bf16.mxu0 0
    %288 = vmatpush1.bf16.msra.mxu0 0
    %289 = vmatprep.subr.bf16.mxu0 0
    %290 = vmatpush1.bf16.msra.mxu0 0
    %291 = vmatprep.subr.bf16.mxu0 0
    %292 = vmatpush1.bf16.msra.mxu0 0
    %293 = vmatprep.mubr.bf16.mxu0 0
    %294 = vmatmul.mubr.bf16.gmra.mrb[0].mxu0 %v255
    %v295 = vpop.f32.mrb[0].mxu0
    %v296 = vadd.f32 0.0, %v295
    %v297 = vpop.f32.mrb[0].mxu0
    %v298 = vpop.f32.mrb[0].mxu0
    %v299 = vpop.f32.mrb[0].mxu0
    %300 = vdwg.mxu0
    %v301 = vsel %vm109, %v296, 0.0
    %302 = vadd.xlane.f32.xlu0 %v301
    %v303 = vpop.xlane.xlu0 %302
    %v304 = vmul.f32 %v303, 0.0625
    %v305 = vsub.f32 %v296, %v304
    %v306 = vmul.f32 %v305, %v305
    %v307 = vsel %vm109, %v306, 0.0
    %308 = vadd.xlane.f32.xlu0 %v307
    %v309 = vpop.xlane.xlu0 %308
    %v310 = vmul.f32 %v309, 0.0625
    %v311 = vadd.f32 %v310, 1e-05
    %v312 = vrsqrt.pop %v311
    %v313 = vmul.f32 %v305, %v312
    %v314 = vld [vmem:[%s5] sm:$0xff]
    %316 = vset.pattern.permute.xlu0 0
    %317 = vperm.xlu0 %316, %v314
    %v318 = vpop.permute.xlu0 %317
    %v320 = vmul.f32 %v313, %v318
    %v321 = vld [vmem:[%s6] sm:$0xff]
    %323 = vset.pattern.permute.xlu0 0
    %324 = vperm.xlu0 %323, %v321
    %v325 = vpop.permute.xlu0 %324
    %v327 = vadd.f32 %v320, %v325
    %v328 = vld [vmem:[%s8] sm:$0xf]
    %v329 = vld [vmem:[%s7] sm:$0x3]
    %v331 = vsel %vm142, %v328, 0
    %v334 = vsel %vm65, %v329, 0
    %336 = vmatprep.subr.bf16.mxu0 0
    %337 = vmatpush1.bf16.msra.mxu0 %v334
    %338 = vmatprep.subr.bf16.mxu0 0
    %339 = vmatpush1.bf16.msra.mxu0 0
    %340 = vmatprep.subr.bf16.mxu0 0
    %341 = vmatpush1.bf16.msra.mxu0 0
    %342 = vmatprep.subr.bf16.mxu0 0
    %343 = vmatpush1.bf16.msra.mxu0 0
    %344 = vmatprep.subr.bf16.mxu0 0
    %345 = vmatpush1.bf16.msra.mxu0 0
    %346 = vmatprep.subr.bf16.mxu0 0
    %347 = vmatpush1.bf16.msra.mxu0 0
    %348 = vmatprep.subr.bf16.mxu0 0
    %349 = vmatpush1.bf16.msra.mxu0 0
    %350 = vmatprep.subr.bf16.mxu0 0
    %351 = vmatpush1.bf16.msra.mxu0 0
    %352 = vmatprep.subr.bf16.mxu0 0
    %353 = vmatpush1.bf16.msra.mxu0 0
    %354 = vmatprep.subr.bf16.mxu0 0
    %355 = vmatpush1.bf16.msra.mxu0 0
    %356 = vmatprep.subr.bf16.mxu0 0
    %357 = vmatpush1.bf16.msra.mxu0 0
    %358 = vmatprep.subr.bf16.mxu0 0
    %359 = vmatpush1.bf16.msra.mxu0 0
    %360 = vmatprep.subr.bf16.mxu0 0
    %361 = vmatpush1.bf16.msra.mxu0 0
    %362 = vmatprep.subr.bf16.mxu0 0
    %363 = vmatpush1.bf16.msra.mxu0 0
    %364 = vmatprep.subr.bf16.mxu0 0
    %365 = vmatpush1.bf16.msra.mxu0 0
    %366 = vmatprep.subr.bf16.mxu0 0
    %367 = vmatpush1.bf16.msra.mxu0 0
    %368 = vmatprep.mubr.bf16.mxu0 0
    %369 = vmatmul.mubr.bf16.gmra.mrb[0].mxu0 %v331
    %v370 = vpop.f32.mrb[0].mxu0
    %v371 = vadd.f32 0.0, %v370
    %v372 = vpop.f32.mrb[0].mxu0
    %v373 = vpop.f32.mrb[0].mxu0
    %v374 = vpop.f32.mrb[0].mxu0
    %375 = vdwg.mxu0
    %v376 = vsel %vm109, %v371, 0.0
    %377 = vadd.xlane.f32.xlu0 %v376
    %v378 = vpop.xlane.xlu0 %377
    %v379 = vmul.f32 %v378, 0.0625
    %v380 = vsub.f32 %v371, %v379
    %v381 = vmul.f32 %v380, %v380
    %v382 = vsel %vm109, %v381, 0.0
    %383 = vadd.xlane.f32.xlu0 %v382
    %v384 = vpop.xlane.xlu0 %383
    %v385 = vmul.f32 %v384, 0.0625
    %v386 = vadd.f32 %v385, 1e-05
    %v387 = vrsqrt.pop %v386
    %v388 = vmul.f32 %v380, %v387
    %v389 = vld [vmem:[%s9] sm:$0xff]
    %391 = vset.pattern.permute.xlu0 0
    %392 = vperm.xlu0 %391, %v389
    %v393 = vpop.permute.xlu0 %392
    %v395 = vmul.f32 %v388, %v393
    %v396 = vld [vmem:[%s10] sm:$0xff]
    %398 = vset.pattern.permute.xlu0 0
    %399 = vperm.xlu0 %398, %v396
    %v400 = vpop.permute.xlu0 %399
    %v402 = vadd.f32 %v395, %v400
    %v403 = vmax.f32 %v402, 0.0
    %v404 = vadd.f32 %v327, %v403
    %v405 = vmax.f32 %v404, 0.0
    %406 = vst.msk [vmem:[#allocation2] sm:$0xff] %vm109, %v405
    // Predicated region
    $region46: #{tpu_custom_call.1} parent=1 // pred_check
      _
    $region47: #{tpu_custom_call.1} parent=1 // pred_check_branch
      %408 = sbr.rel (0) target = $region49
    $region48: #{tpu_custom_call.1} parent=1 // pred_region
      %s410 = ssub.s32 128, 128
      %411 = vsyncadd [#allocation3], %s410
      %s413 = sshll.u32 [#allocation2], 4
      %s414 = int_to_ptr.vmem [resolvable:$true] %s413
      %416 = dma.vmem_to_hbm [thread:$0]  %s414, 128, %s11, [#allocation3]
    $region49: #{tpu_custom_call.1} parent=1 // pred_fallthru
      _
    // Predicated region
    $region50: #{tpu_custom_call.1} parent=1 // pred_check
      _
    $region51: #{tpu_custom_call.1} parent=1 // pred_check_branch
      %418 = sbr.rel (0) target = $region53
    $region52: #{tpu_custom_call.1} parent=1 // pred_region
      %419 = dma.done [#allocation3], 128
    $region53: #{tpu_custom_call.1} parent=1 // pred_fallthru
      _
    %420 = vsyncpa [#allocation3], 1

</llo_original>
